<compile_context>
chip_gen: v7x
topology: tpu7x:2x2x1
jax: 0.10.0
libtpu: 0.0.40
codegen_flags: <defaults>
</compile_context>

<pallas_src>
import functools

import jax
import jax.numpy as jnp
from jax.experimental import pallas as pl
from jax.experimental.pallas import tpu as pltpu

HIDDEN = 24      # fixed by the module definition (nn.Linear(state_size, 24))
LANE = 128       # TPU lane width


def _round_up(n, m):
    return ((n + m - 1) // m) * m


def qnetwork_kernel(x_ref, w1_ref, bias_ref, w2_ref, out_ref):
    # fc1: h = relu(x @ W1p + b1p)   -> (TM, 128), lane-dense
    h = jnp.dot(x_ref[...], w1_ref[...], preferred_element_type=jnp.float32)
    h = jnp.maximum(h + bias_ref[0:1, :], 0.0)
    # fc2: y = h @ W2p + b2p         -> (TM, 128), lane-dense store
    y = jnp.dot(h, w2_ref[...], preferred_element_type=jnp.float32)
    out_ref[...] = (y + bias_ref[1:2, :]).astype(out_ref.dtype)


@functools.partial(jax.jit, static_argnames=("action_size", "tm"))
def qnetwork_forward(x, w1_p, bias_p, w2_p, *, action_size, tm=None):
    """x: [B, S]   w1_p: [S, 128]   bias_p: [2, 128]   w2_p: [128, 128]."""
    B, S = x.shape
    Hp = w1_p.shape[1]
    Ap = w2_p.shape[1]

    # Batch tile: multiple of 8 (f32 sublane). Small batches -> one tile of 8;
    # realistic replay batches -> 256-row tiles sharded across cores.
    if tm is None:
        tm = min(256, _round_up(B, 8))
    Bp = _round_up(B, tm)
    if Bp != B:
        x = jnp.pad(x, ((0, Bp - B), (0, 0)))

    out_padded = pl.pallas_call(
        qnetwork_kernel,
        out_shape=jax.ShapeDtypeStruct((Bp, Ap), x.dtype),
        grid_spec=pl.GridSpec(
            grid=(Bp // tm,),
            in_specs=[
                pl.BlockSpec((tm, S), lambda i: (i, 0)),    # x: batch-tiled
                pl.BlockSpec((S, Hp), lambda i: (0, 0)),    # W1p: resident
                pl.BlockSpec((2, Hp), lambda i: (0, 0)),    # packed biases
                pl.BlockSpec((Hp, Ap), lambda i: (0, 0)),   # W2p: resident
            ],
            out_specs=pl.BlockSpec((tm, Ap), lambda i: (i, 0)),
        ),
        compiler_params=pltpu.CompilerParams(
            # Batch tiles are independent -> shards across v7x's 2 TCs.
            dimension_semantics=("parallel",),
        ),
    )(x, w1_p, bias_p, w2_p)

    # Slice away batch padding and the zero-padded action columns.
    return out_padded[:B, :action_size]


def init_params(key, state_size, hidden, action_size, dtype=jnp.float32):
    """Deterministic init mimicking nn.Linear's uniform(-1/sqrt(fan_in), +)."""
    k1, k2, k3, k4 = jax.random.split(key, 4)
    bound1 = 1.0 / jnp.sqrt(state_size)
    bound2 = 1.0 / jnp.sqrt(hidden)
    # Stored pre-transposed relative to PyTorch's [out, in] convention.
    w1_t = jax.random.uniform(k1, (state_size, hidden), dtype, -bound1, bound1)
    b1 = jax.random.uniform(k2, (hidden,), dtype, -bound1, bound1)
    w2_t = jax.random.uniform(k3, (hidden, action_size), dtype, -bound2, bound2)
    b2 = jax.random.uniform(k4, (action_size,), dtype, -bound2, bound2)
    return w1_t, b1, w2_t, b2


def pad_params(w1_t, b1, w2_t, b2):
    """Zero-pad hidden/action dims to 128 lanes; pack biases into one array."""
    S, H = w1_t.shape
    _, A = w2_t.shape
    Hp = _round_up(H, LANE)
    Ap = _round_up(A, LANE)
    w1_p = jnp.zeros((S, Hp), w1_t.dtype).at[:, :H].set(w1_t)
    w2_p = jnp.zeros((Hp, Ap), w2_t.dtype).at[:H, :A].set(w2_t)
    bias_p = jnp.zeros((2, max(Hp, Ap)), b1.dtype)
    bias_p = bias_p.at[0, :H].set(b1)
    bias_p = bias_p.at[1, :A].set(b2)
    return w1_p, bias_p, w2_p


if __name__ == "__main__":
    state_size = 8
    action_size = 4
    batch = 2

    key = jax.random.PRNGKey(0)
    k_params, k_x = jax.random.split(key)
    w1_t, b1, w2_t, b2 = init_params(k_params, state_size, HIDDEN, action_size)
    w1_p, bias_p, w2_p = pad_params(w1_t, b1, w2_t, b2)

    x = jax.random.normal(k_x, (batch, state_size), jnp.float32)

    out = qnetwork_forward(x, w1_p, bias_p, w2_p, action_size=action_size)
    out = jax.block_until_ready(out)

    # Pure-JAX reference (same math as torch: relu(x@W1^T+b1)@W2^T+b2),
    # computed with the *unpadded* logical parameters.
    ref = jnp.maximum(x @ w1_t + b1, 0.0) @ w2_t + b2
    assert out.shape == (batch, action_size)
    assert jnp.allclose(out, ref, atol=1e-5, rtol=1e-5)

    print("KERNEL_OK")
</pallas_src>

<mosaic_0001>
module attributes {stable_mosaic.version = 11 : i64} {
  func.func @qnetwork_kernel(%arg0: i32, %arg1: memref<8x8xf32, #tpu.memory_space<vmem>>, %arg2: memref<8x128xf32, #tpu.memory_space<vmem>>, %arg3: memref<2x128xf32, #tpu.memory_space<vmem>>, %arg4: memref<128x128xf32, #tpu.memory_space<vmem>>, %arg5: memref<8x128xf32, #tpu.memory_space<vmem>>) attributes {dimension_semantics = [#tpu.dimension_semantics<parallel>], iteration_bounds = array<i64: 1>, scalar_prefetch = 0 : i64, scratch_operands = 0 : i64, tpu.core_type = #tpu.core_type<tc>, window_params = [{transform_indices = @transform_0, window_bounds = array<i64: 8, 8>}, {pipeline_mode = #tpu.pipeline_mode<synchronous>, transform_indices = @transform_1, window_bounds = array<i64: 8, 128>}, {pipeline_mode = #tpu.pipeline_mode<synchronous>, transform_indices = @transform_2, window_bounds = array<i64: 2, 128>}, {pipeline_mode = #tpu.pipeline_mode<synchronous>, transform_indices = @transform_3, window_bounds = array<i64: 128, 128>}, {transform_indices = @transform_4, window_bounds = array<i64: 8, 128>}]} {
    %c0 = arith.constant 0 : index
    %c0_0 = arith.constant 0 : index
    %0 = vector.load %arg1[%c0, %c0_0] : memref<8x8xf32, #tpu.memory_space<vmem>>, vector<8x8xf32>
    %c0_1 = arith.constant 0 : index
    %c0_2 = arith.constant 0 : index
    %1 = vector.load %arg2[%c0_1, %c0_2] : memref<8x128xf32, #tpu.memory_space<vmem>>, vector<8x128xf32>
    %cst = arith.constant dense<0.000000e+00> : vector<8x128xf32>
    %2 = tpu.matmul %0, %1, %cst {dimension_numbers = #tpu.dot_dimension_numbers<[1], [0], [0], [1], [0, 0, 1, 1], [], []>} : vector<8x8xf32>, vector<8x128xf32>, vector<8x128xf32> -> vector<8x128xf32>
    %c0_3 = arith.constant 0 : index
    %c0_4 = arith.constant 0 : index
    %3 = vector.load %arg3[%c0_3, %c0_4] : memref<2x128xf32, #tpu.memory_space<vmem>>, vector<1x128xf32>
    %4 = vector.broadcast %3 : vector<1x128xf32> to vector<8x128xf32>
    %5 = arith.addf %2, %4 : vector<8x128xf32>
    %cst_5 = arith.constant 0.000000e+00 : f32
    %6 = vector.broadcast %cst_5 : f32 to vector<8x128xf32>
    %7 = arith.maximumf %5, %6 : vector<8x128xf32>
    %c0_6 = arith.constant 0 : index
    %c0_7 = arith.constant 0 : index
    %8 = vector.load %arg4[%c0_6, %c0_7] : memref<128x128xf32, #tpu.memory_space<vmem>>, vector<128x128xf32>
    %cst_8 = arith.constant dense<0.000000e+00> : vector<8x128xf32>
    %9 = tpu.matmul %7, %8, %cst_8 {dimension_numbers = #tpu.dot_dimension_numbers<[1], [0], [0], [1], [0, 0, 1, 1], [], []>} : vector<8x128xf32>, vector<128x128xf32>, vector<8x128xf32> -> vector<8x128xf32>
    %c1 = arith.constant 1 : index
    %c0_9 = arith.constant 0 : index
    %10 = vector.load %arg3[%c1, %c0_9] : memref<2x128xf32, #tpu.memory_space<vmem>>, vector<1x128xf32>
    %11 = vector.broadcast %10 : vector<1x128xf32> to vector<8x128xf32>
    %12 = arith.addf %9, %11 : vector<8x128xf32>
    %c0_10 = arith.constant 0 : index
    %c0_11 = arith.constant 0 : index
    %13 = vector.load %arg5[%c0_10, %c0_11] : memref<8x128xf32, #tpu.memory_space<vmem>>, vector<8x128xf32>
    tpu.vector_store %arg5[%c0_10, %c0_11], %12 {strides = array<i32>} : memref<8x128xf32, #tpu.memory_space<vmem>>, vector<8x128xf32>,
    return
  }
  func.func @transform_0(%arg0: i32) -> (i32, i32) {
    %c0_i32 = arith.constant 0 : i32
    %c0_i32_0 = arith.constant 0 : i32
    return %arg0, %c0_i32 : i32, i32
  }
  func.func @transform_1(%arg0: i32) -> (i32, i32) {
    %c0_i32 = arith.constant 0 : i32
    %c0_i32_0 = arith.constant 0 : i32
    %c0_i32_1 = arith.constant 0 : i32
    return %c0_i32, %c0_i32_0 : i32, i32
  }
  func.func @transform_2(%arg0: i32) -> (i32, i32) {
    %c0_i32 = arith.constant 0 : i32
    %c0_i32_0 = arith.constant 0 : i32
    %c0_i32_1 = arith.constant 0 : i32
    return %c0_i32, %c0_i32_0 : i32, i32
  }
  func.func @transform_3(%arg0: i32) -> (i32, i32) {
    %c0_i32 = arith.constant 0 : i32
    %c0_i32_0 = arith.constant 0 : i32
    %c0_i32_1 = arith.constant 0 : i32
    return %c0_i32, %c0_i32_0 : i32, i32
  }
  func.func @transform_4(%arg0: i32) -> (i32, i32) {
    %c0_i32 = arith.constant 0 : i32
    %c0_i32_0 = arith.constant 0 : i32
    return %arg0, %c0_i32 : i32, i32
  }
}

</mosaic_0001>

<llo_original>
// kernel: qnetwork_forward.1
$region0: #{qnetwork_forward.1}
  #allocation0 [shape = 'u32[]', space=smem, size = 0x4, offset = 0x4, fixed_abs, tag = 'smem constant byte address 0x4 - core index']
  #allocation1 [shape = 'u32[144,128]{1,0:T(1,128)}', space=vmem, size = 0x12000, scoped, tag = 'internal scratch']
  %s0 = inlined_call_operand.vmem [shape: f32[8,8], index: 0, kind: input, shape index: {}]
  %s1 = inlined_call_operand.vmem [shape: f32[8,128], index: 1, kind: input, shape index: {}]
  %s2 = inlined_call_operand.vmem [shape: f32[2,128], index: 2, kind: input, shape index: {}]
  %s3 = inlined_call_operand.hbm [shape: f32[128,128], index: 3, kind: input, shape index: {}]
  %s4 = inlined_call_operand.vmem [shape: f32[8,128], index: 4, kind: output, shape index: {}]
  %s5 = sld [smem:[#allocation0]]
  $region30: #{qnetwork_forward.1} parent=0
    _
  %s7 = ssub.s32 1, %s5
  %s8 = scalar_select 0, %s7, %s5
  $region1: #{qnetwork_forward.1} parent=0
    #allocation2 [shape = 'u8[65536]{0}', space=vmem, size = 0x10000, scoped, tag = 'input window, operand 3, single buffered']
    #allocation3 [shape = 's32[1]{0}', space=sflag, size = 0x4, scoped, tag = 'scoped memory for qnetwork_forward.1']
    %9 = vsyncpa [#allocation3], 0
    // Predicated region
    $region2: #{qnetwork_forward.1} parent=1 // pred_check
      _
    $region3: #{qnetwork_forward.1} parent=1 // pred_check_branch
      %11 = sbr.rel (0) target = $region5
    $region4: #{qnetwork_forward.1} parent=1 // pred_region
      _
    $region5: #{qnetwork_forward.1} parent=1 // pred_fallthru
      _
    // Predicated region
    $region6: #{qnetwork_forward.1} parent=1 // pred_check
      _
    $region7: #{qnetwork_forward.1} parent=1 // pred_check_branch
      %13 = sbr.rel (0) target = $region9
    $region8: #{qnetwork_forward.1} parent=1 // pred_region
      _
    $region9: #{qnetwork_forward.1} parent=1 // pred_fallthru
      _
    // Predicated region
    $region10: #{qnetwork_forward.1} parent=1 // pred_check
      _
    $region11: #{qnetwork_forward.1} parent=1 // pred_check_branch
      %15 = sbr.rel (0) target = $region13
    $region12: #{qnetwork_forward.1} parent=1 // pred_region
      _
    $region13: #{qnetwork_forward.1} parent=1 // pred_fallthru
      _
    // Predicated region
    $region14: #{qnetwork_forward.1} parent=1 // pred_check
      _
    $region15: #{qnetwork_forward.1} parent=1 // pred_check_branch
      %17 = sbr.rel (0) target = $region17
    $region16: #{qnetwork_forward.1} parent=1 // pred_region
      %s19 = ssub.s32 2048, 2048
      %20 = vsyncadd [#allocation3], %s19
      %s21 = sshll.u32 [#allocation2], 4
      %s22 = int_to_ptr.vmem [resolvable:$true] %s21
      %27 = dma.hbm_to_vmem [thread:$0]  %s3, 2048, %s22, [#allocation3], 128, 128, 8
    $region17: #{qnetwork_forward.1} parent=1 // pred_fallthru
      _
    // Predicated region
    $region18: #{qnetwork_forward.1} parent=1 // pred_check
      _
    $region19: #{qnetwork_forward.1} parent=1 // pred_check_branch
      %29 = sbr.rel (0) target = $region21
    $region20: #{qnetwork_forward.1} parent=1 // pred_region
      %30 = dma.done [#allocation3], 2048
    $region21: #{qnetwork_forward.1} parent=1 // pred_fallthru
      _
    %v31 = vld [vmem:[%s0] sm:$0xff]
    %v32 = vld [vmem:[%s1] sm:$0xff]
    %v33 = vld [vmem:[%s2] sm:$0x1]
    %v34 = vlaneseq
    %v35 = vshrl.u32 %v34, 7
    %v36 = vsub.s32 0, %v35
    %v37 = vrot.slane %v33, %v36
    %vm38 = vcmask 64512
    %v40 = vsel %vm38, %v31, 0
    %42 = vmatprep.subr.mxu0 0.0
    %43 = vmatpush1.msra.mxu0 %v32
    %44 = vmatprep.subr.mxu0 0.0
    %45 = vmatpush1.msra.mxu0 0.0
    %46 = vmatprep.subr.mxu0 0.0
    %47 = vmatpush1.msra.mxu0 0.0
    %48 = vmatprep.subr.mxu0 0.0
    %49 = vmatpush1.msra.mxu0 0.0
    %50 = vmatprep.subr.mxu0 0.0
    %51 = vmatpush1.msra.mxu0 0.0
    %52 = vmatprep.subr.mxu0 0.0
    %53 = vmatpush1.msra.mxu0 0.0
    %54 = vmatprep.subr.mxu0 0.0
    %55 = vmatpush1.msra.mxu0 0.0
    %56 = vmatprep.subr.mxu0 0.0
    %57 = vmatpush1.msra.mxu0 0.0
    %58 = vmatprep.subr.mxu0 0.0
    %59 = vmatpush1.msra.mxu0 0.0
    %60 = vmatprep.subr.mxu0 0.0
    %61 = vmatpush1.msra.mxu0 0.0
    %62 = vmatprep.subr.mxu0 0.0
    %63 = vmatpush1.msra.mxu0 0.0
    %64 = vmatprep.subr.mxu0 0.0
    %65 = vmatpush1.msra.mxu0 0.0
    %66 = vmatprep.subr.mxu0 0.0
    %67 = vmatpush1.msra.mxu0 0.0
    %68 = vmatprep.subr.mxu0 0.0
    %69 = vmatpush1.msra.mxu0 0.0
    %70 = vmatprep.subr.mxu0 0.0
    %71 = vmatpush1.msra.mxu0 0.0
    %72 = vmatprep.subr.mxu0 0.0
    %73 = vmatpush1.msra.mxu0 0.0
    %74 = vmatprep.subr.mxu0 0.0
    %75 = vmatpush1.msra.mxu0 0.0
    %76 = vmatprep.subr.mxu0 0.0
    %77 = vmatpush1.msra.mxu0 0.0
    %78 = vmatprep.subr.mxu0 0.0
    %79 = vmatpush1.msra.mxu0 0.0
    %80 = vmatprep.subr.mxu0 0.0
    %81 = vmatpush1.msra.mxu0 0.0
    %82 = vmatprep.subr.mxu0 0.0
    %83 = vmatpush1.msra.mxu0 0.0
    %84 = vmatprep.subr.mxu0 0.0
    %85 = vmatpush1.msra.mxu0 0.0
    %86 = vmatprep.subr.mxu0 0.0
    %87 = vmatpush1.msra.mxu0 0.0
    %88 = vmatprep.subr.mxu0 0.0
    %89 = vmatpush1.msra.mxu0 0.0
    %90 = vmatprep.subr.mxu0 0.0
    %91 = vmatpush1.msra.mxu0 0.0
    %92 = vmatprep.subr.mxu0 0.0
    %93 = vmatpush1.msra.mxu0 0.0
    %94 = vmatprep.subr.mxu0 0.0
    %95 = vmatpush1.msra.mxu0 0.0
    %96 = vmatprep.subr.mxu0 0.0
    %97 = vmatpush1.msra.mxu0 0.0
    %98 = vmatprep.subr.mxu0 0.0
    %99 = vmatpush1.msra.mxu0 0.0
    %100 = vmatprep.subr.mxu0 0.0
    %101 = vmatpush1.msra.mxu0 0.0
    %102 = vmatprep.subr.mxu0 0.0
    %103 = vmatpush1.msra.mxu0 0.0
    %104 = vmatprep.subr.mxu0 0.0
    %105 = vmatpush1.msra.mxu0 0.0
    %106 = vmatprep.mubr.f32.mxu0 0.0
    %107 = vmatmul.mubr.f32.gmra.mrb[0].mxu0 %v40
    %v108 = vpop.f32.mrb[0].mxu0
    %v109 = vadd.f32 %v37, %v108
    %v110 = vpop.f32.mrb[0].mxu0
    %111 = vdwg.mxu0
    %v112 = vmax.f32 %v109, 0.0
    %v113 = vld [vmem:[#allocation2] sm:$0xff]
    %v114 = vld [vmem:[#allocation2 + $0x8] sm:$0xff]
    %v115 = vld [vmem:[#allocation2 + $0x10] sm:$0xff]
    %v116 = vld [vmem:[#allocation2 + $0x18] sm:$0xff]
    %v117 = vld [vmem:[#allocation2 + $0x20] sm:$0xff]
    %v118 = vld [vmem:[#allocation2 + $0x28] sm:$0xff]
    %v119 = vld [vmem:[#allocation2 + $0x30] sm:$0xff]
    %v120 = vld [vmem:[#allocation2 + $0x38] sm:$0xff]
    %v121 = vld [vmem:[#allocation2 + $0x40] sm:$0xff]
    %v122 = vld [vmem:[#allocation2 + $0x48] sm:$0xff]
    %v123 = vld [vmem:[#allocation2 + $0x50] sm:$0xff]
    %v124 = vld [vmem:[#allocation2 + $0x58] sm:$0xff]
    %v125 = vld [vmem:[#allocation2 + $0x60] sm:$0xff]
    %v126 = vld [vmem:[#allocation2 + $0x68] sm:$0xff]
    %v127 = vld [vmem:[#allocation2 + $0x70] sm:$0xff]
    %v128 = vld [vmem:[#allocation2 + $0x78] sm:$0xff]
    %v129 = vld [vmem:[%s2 + $0x1] sm:$0x1]
    %v130 = vlaneseq
    %v131 = vshrl.u32 %v130, 7
    %v132 = vsub.s32 0, %v131
    %v133 = vrot.slane %v129, %v132
    %134 = vmatprep.subr.mxu0 0.0
    %135 = vmatpush1.msra.mxu0 %v113
    %136 = vmatprep.subr.mxu0 0.0
    %137 = vmatpush1.msra.mxu0 %v114
    %138 = vmatprep.subr.mxu0 0.0
    %139 = vmatpush1.msra.mxu0 %v115
    %140 = vmatprep.subr.mxu0 0.0
    %141 = vmatpush1.msra.mxu0 %v116
    %142 = vmatprep.subr.mxu0 0.0
    %143 = vmatpush1.msra.mxu0 %v117
    %144 = vmatprep.subr.mxu0 0.0
    %145 = vmatpush1.msra.mxu0 %v118
    %146 = vmatprep.subr.mxu0 0.0
    %147 = vmatpush1.msra.mxu0 %v119
    %148 = vmatprep.subr.mxu0 0.0
    %149 = vmatpush1.msra.mxu0 %v120
    %150 = vmatprep.subr.mxu0 0.0
    %151 = vmatpush1.msra.mxu0 %v121
    %152 = vmatprep.subr.mxu0 0.0
    %153 = vmatpush1.msra.mxu0 %v122
    %154 = vmatprep.subr.mxu0 0.0
    %155 = vmatpush1.msra.mxu0 %v123
    %156 = vmatprep.subr.mxu0 0.0
    %157 = vmatpush1.msra.mxu0 %v124
    %158 = vmatprep.subr.mxu0 0.0
    %159 = vmatpush1.msra.mxu0 %v125
    %160 = vmatprep.subr.mxu0 0.0
    %161 = vmatpush1.msra.mxu0 %v126
    %162 = vmatprep.subr.mxu0 0.0
    %163 = vmatpush1.msra.mxu0 %v127
    %164 = vmatprep.subr.mxu0 0.0
    %165 = vmatpush1.msra.mxu0 %v128
    %166 = vmatprep.subr.mxu0 0.0
    %167 = vmatpush1.msra.mxu0 0.0
    %168 = vmatprep.subr.mxu0 0.0
    %169 = vmatpush1.msra.mxu0 0.0
    %170 = vmatprep.subr.mxu0 0.0
    %171 = vmatpush1.msra.mxu0 0.0
    %172 = vmatprep.subr.mxu0 0.0
    %173 = vmatpush1.msra.mxu0 0.0
    %174 = vmatprep.subr.mxu0 0.0
    %175 = vmatpush1.msra.mxu0 0.0
    %176 = vmatprep.subr.mxu0 0.0
    %177 = vmatpush1.msra.mxu0 0.0
    %178 = vmatprep.subr.mxu0 0.0
    %179 = vmatpush1.msra.mxu0 0.0
    %180 = vmatprep.subr.mxu0 0.0
    %181 = vmatpush1.msra.mxu0 0.0
    %182 = vmatprep.subr.mxu0 0.0
    %183 = vmatpush1.msra.mxu0 0.0
    %184 = vmatprep.subr.mxu0 0.0
    %185 = vmatpush1.msra.mxu0 0.0
    %186 = vmatprep.subr.mxu0 0.0
    %187 = vmatpush1.msra.mxu0 0.0
    %188 = vmatprep.subr.mxu0 0.0
    %189 = vmatpush1.msra.mxu0 0.0
    %190 = vmatprep.subr.mxu0 0.0
    %191 = vmatpush1.msra.mxu0 0.0
    %192 = vmatprep.subr.mxu0 0.0
    %193 = vmatpush1.msra.mxu0 0.0
    %194 = vmatprep.subr.mxu0 0.0
    %195 = vmatpush1.msra.mxu0 0.0
    %196 = vmatprep.subr.mxu0 0.0
    %197 = vmatpush1.msra.mxu0 0.0
    %198 = vmatprep.mubr.f32.mxu0 0.0
    %199 = vmatmul.mubr.f32.gmra.mrb[0].mxu0 %v112
    %v200 = vpop.f32.mrb[0].mxu0
    %v201 = vadd.f32 %v133, %v200
    %v202 = vpop.f32.mrb[0].mxu0
    %203 = vdwg.mxu0
    %204 = vst [vmem:[%s4] sm:$0xff] %v201
    // Predicated region
    $region22: #{qnetwork_forward.1} parent=1 // pred_check
      _
    $region23: #{qnetwork_forward.1} parent=1 // pred_check_branch
      %206 = sbr.rel (0) target = $region25
    $region24: #{qnetwork_forward.1} parent=1 // pred_region
      _
    $region25: #{qnetwork_forward.1} parent=1 // pred_fallthru
      _
    // Predicated region
    $region26: #{qnetwork_forward.1} parent=1 // pred_check
      _
    $region27: #{qnetwork_forward.1} parent=1 // pred_check_branch
      %208 = sbr.rel (0) target = $region29
    $region28: #{qnetwork_forward.1} parent=1 // pred_region
      _
    $region29: #{qnetwork_forward.1} parent=1 // pred_fallthru
      _
    %209 = vsyncpa [#allocation3], 1

</llo_original>
